<compile_context>
chip_gen: v7x
topology: tpu7x:2x2x1
jax: 0.10.0
libtpu: 0.0.40
codegen_flags: <defaults>
</compile_context>

<pallas_src>
import numpy as np
import jax
import jax.numpy as jnp
from jax import lax
from jax.experimental import pallas as pl
from jax.experimental.pallas import tpu as pltpu

_CPAD = 8      # x has 3 channels; pad to 8 so patch slabs stay sublane-aligned
_EPS = 1e-5

# +1 if pltpu.roll follows the np.roll sign convention (elements move toward
# higher indices for positive shift), -1 if flipped.  Set by the runtime probe.
_ROLL_SIGN = 1


def _probe_roll_convention():
    """Cheap one-off probe of pltpu.roll's shift direction (robustness)."""
    global _ROLL_SIGN
    x = np.arange(8 * 128, dtype=np.float32).reshape(8, 128)

    def k(x_ref, o_ref):
        o_ref[...] = pltpu.roll(x_ref[...], 3, axis=1)

    y = pl.pallas_call(
        k, out_shape=jax.ShapeDtypeStruct((8, 128), jnp.float32))(jnp.asarray(x))
    y = np.asarray(jax.block_until_ready(y))
    if np.array_equal(y, np.roll(x, 3, axis=1)):
        _ROLL_SIGN = 1
    elif np.array_equal(y, np.roll(x, -3, axis=1)):
        _ROLL_SIGN = -1
    else:
        raise RuntimeError("unexpected pltpu.roll semantics")


# --------------------------------- the kernel --------------------------------

def _make_kernel(B, N, C1, C2, TC, K, KF):
    HW = N * N
    LANES = HW * B
    ROW = N * B                        # lanes per spatial row (w-major, batch-minor)
    CMAX = max(C1, C2, TC, _CPAD)      # widest conv input channel count
    roll_sign = _ROLL_SIGN

    def kernel(rpos_ref, x_ref, sn_ref,
               fw1_ref, fb1_ref, fg_ref, fbe_ref, fw2_ref, fb2_ref,
               tws_ref,
               gw1_ref, gb1_ref, gg_ref, gbe_ref, gw2_ref, gb2_ref,
               hw1_ref, hb1_ref, hg_ref, hbe_ref,
               wsum_ref, bsel_ref, fconst_ref,
               e_ref, pat_ref):
        f32 = jnp.float32

        # hoisted wrap-fix table: rpos[c, l] = l % (N*B)  (precomputed in wrapper)
        rpos = rpos_ref[...]                               # (CMAX, LANES) int32

        def lroll(v, shift):
            # out[:, l] = v[:, (l - shift) mod LANES]   (np.roll convention)
            s = (roll_sign * shift) % LANES
            if s == 0:
                return v
            return pltpu.roll(v, s, axis=1)

        def wshift(v, dx):
            # out[:, (h*N+w)*B+b] = v[:, (h*N + (w+dx)%N)*B + b]
            if dx == 0:
                return v
            cin = v.shape[0]
            base = lroll(v, -dx * B)
            if dx > 0:
                alt = lroll(v, -(dx - N) * B)
                m = rpos[0:cin, :] >= (N - dx) * B
            else:
                alt = lroll(v, -(dx + N) * B)
                m = rpos[0:cin, :] < (-dx) * B
            return jnp.where(m, alt, base)

        def build_patches(act, k):
            # act: (cin, LANES) -> pat_ref rows 0:k*k*cin, ordered (ky, kx, c)
            cin = act.shape[0]
            p = k // 2
            slab = jnp.concatenate(
                [wshift(act, dx) for dx in range(-p, p + 1)], axis=0)  # (k*cin, L)
            for ky in range(k):
                dy = ky - p
                sl = slab if dy == 0 else lroll(slab, -dy * ROW)       # exact H wrap
                pat_ref[pl.ds(ky * k * cin, k * cin), :] = sl
            return pat_ref[pl.ds(0, k * k * cin), :]

        def conv_circ(act, wf, bias, k):
            out = jnp.dot(wf, build_patches(act, k), preferred_element_type=f32)
            return out if bias is None else out + bias

        def batchnorm(z, gamma, beta):
            # PyTorch training-mode BN: batch mean / biased variance over (B,H,W)
            inv = 1.0 / float(LANES)
            mean = jnp.sum(z, axis=1, keepdims=True) * inv
            d = z - mean
            var = jnp.sum(d * d, axis=1, keepdims=True) * inv
            return d * (gamma * lax.rsqrt(var + _EPS)) + beta

        def nonlinear(act, w1, b1, g, be, w2, b2, k):
            z = jnp.tanh(batchnorm(conv_circ(act, w1, b1, k), g, be))
            return conv_circ(z, w2, b2, k)

        x = x_ref[...]                                     # (_CPAD, LANES)
        sn = sn_ref[...]                                   # (C2,    LANES)

        # ---- Fn+1 = f_mapping(Sn) ----
        fn1 = nonlinear(sn, fw1_ref[...], fb1_ref[...], fg_ref[...], fbe_ref[...],
                        fw2_ref[...], fb2_ref[...], K)

        # ---- T layer: single stacked dot, product, channel sum ----
        tout = jnp.dot(tws_ref[...], build_patches(x, K),
                       preferred_element_type=f32)         # (6*TC, LANES)
        prod = tout[0:3 * TC, :] * tout[3 * TC:6 * TC, :]  # (3*TC, LANES)
        t = prod[0:TC, :] + prod[TC:2 * TC, :] + prod[2 * TC:3 * TC, :]

        # ---- Gn = g_mapping(T) ----
        gn = nonlinear(t, gw1_ref[...], gb1_ref[...], gg_ref[...], gbe_ref[...],
                       gw2_ref[...], gb2_ref[...], K)

        sn_new = fn1 * gn                                  # (C2, LANES)

        # ---- final mapping: conv1(3x3)+BN+tanh; conv2 + spatial sum collapsed ----
        y = jnp.tanh(batchnorm(conv_circ(sn_new, hw1_ref[...], hb1_ref[...], KF),
                               hg_ref[...], hbe_ref[...]))
        per_cb = jnp.dot(y, bsel_ref[...], preferred_element_type=f32)   # (C2, B)
        e_ref[...] = (jnp.dot(wsum_ref[...], per_cb, preferred_element_type=f32)
                      + fconst_ref[...])

    return kernel


# --------------------------------- the wrapper --------------------------------

def dsnn_qt_forward(x_nchw, sn_nchw, params):
    (f_w1, f_b1, f_g, f_be, f_w2, f_b2,
     t_w0, t_w1,
     g_w1, g_b1, g_g, g_be, g_w2, g_b2,
     h_w1, h_b1, h_g, h_be, h_w2, h_b2) = params

    f32 = jnp.float32
    B, cin_x, N, _ = x_nchw.shape
    C2 = sn_nchw.shape[1]
    C1 = f_w1.shape[-1]
    TC = t_w0.shape[-1]
    K = f_w1.shape[0]
    KF = h_w1.shape[0]
    HW = N * N
    LANES = HW * B
    CMAX = max(C1, C2, TC, _CPAD)

    # activations: (channels, N*N*B) with lane = (h*N + w)*B + b
    def to_lanes(a):                     # (B, C, N, N) -> (C, N*N*B)
        return jnp.transpose(a.astype(f32), (1, 2, 3, 0)).reshape(a.shape[1], LANES)

    x_flat = to_lanes(x_nchw)
    x_pad = jnp.concatenate(
        [x_flat, jnp.zeros((_CPAD - cin_x, LANES), f32)], axis=0)
    sn_flat = to_lanes(sn_nchw)

    # hoisted wrap-fix table (lane position within a w-row), at max channel height
    rpos = jnp.broadcast_to(
        (jnp.arange(LANES, dtype=jnp.int32) % (N * B))[None, :], (CMAX, LANES))

    def flat_w(w):                       # (k,k,ci,co) -> (co, k*k*ci), ci minor
        k, _, ci, co = w.shape
        return jnp.transpose(w, (3, 0, 1, 2)).reshape(co, k * k * ci).astype(f32)

    def colv(v):
        return v.astype(f32).reshape(-1, 1)

    def t_expand(w):                     # (k,k,TC) -> (3*TC, k*k*_CPAD), shared/3 ch.
        k = w.shape[0]
        wf = jnp.transpose(w, (2, 0, 1)).reshape(TC, k * k).astype(f32)
        e = jnp.zeros((3, TC, k * k, _CPAD), f32)
        for c in range(3):
            e = e.at[c, :, :, c].set(wf)
        return e.reshape(3 * TC, k * k * _CPAD)

    tws = jnp.concatenate([t_expand(t_w0), t_expand(t_w1)], axis=0)  # (6*TC, K*K*_CPAD)

    # final conv2 (3x3 -> 1 ch) + spatial sum collapsed (exact for circular pad):
    #   E_b = HW*b2 + sum_c (sum_taps w2[:,:,c,0]) * (sum_{h,w} y[b,c,h,w])
    wsum = jnp.sum(h_w2.astype(f32), axis=(0, 1)).reshape(1, C2)     # (1, C2)
    f_const = (float(HW) * h_b2.astype(f32)).reshape(1, 1)
    bsel = (jnp.arange(LANES)[:, None] % B ==
            jnp.arange(B)[None, :]).astype(f32)                      # (LANES, B)

    args = (rpos, x_pad, sn_flat,
            flat_w(f_w1), colv(f_b1), colv(f_g), colv(f_be), flat_w(f_w2), colv(f_b2),
            tws,
            flat_w(g_w1), colv(g_b1), colv(g_g), colv(g_be), flat_w(g_w2), colv(g_b2),
            flat_w(h_w1), colv(h_b1), colv(h_g), colv(h_be),
            wsum, bsel, f_const)

    kernel = _make_kernel(B, N, C1, C2, TC, K, KF)
    out = pl.pallas_call(
        kernel,
        out_shape=jax.ShapeDtypeStruct((1, B), f32),
        in_specs=[pl.BlockSpec(memory_space=pltpu.MemorySpace.VMEM) for _ in args],
        out_specs=pl.BlockSpec(memory_space=pltpu.MemorySpace.VMEM),
        scratch_shapes=[pltpu.VMEM((K * K * CMAX, LANES), f32)],     # im2col patches
    )(*args)
    return out[0, :]


# ------------------------- plain-JAX reference (check) ------------------------

def _conv_ref(x, w, b):
    p = w.shape[0] // 2
    xp = jnp.pad(x, ((0, 0), (p, p), (p, p), (0, 0)), mode='wrap')
    o = lax.conv_general_dilated(xp, w, (1, 1), 'VALID',
                                 dimension_numbers=('NHWC', 'HWIO', 'NHWC'),
                                 precision=lax.Precision.HIGHEST)
    return o if b is None else o + b


def _nl_ref(x, w1, b1, g, be, w2, b2):
    y = _conv_ref(x, w1, b1)
    m = jnp.mean(y, axis=(0, 1, 2), keepdims=True)
    v = jnp.mean((y - m) ** 2, axis=(0, 1, 2), keepdims=True)
    y = (y - m) * lax.rsqrt(v + 1e-5) * g + be
    return _conv_ref(jnp.tanh(y), w2, b2)


def _t_ref(x, w0_4d, w1_4d):
    out = 0.0
    for c in range(3):
        xc = x[..., c:c + 1]
        out = out + _conv_ref(xc, w0_4d, None) * _conv_ref(xc, w1_4d, None)
    return out


# ------------------------------------ main ------------------------------------

if __name__ == "__main__":
    _probe_roll_convention()

    B, N = 2, 16
    C_IN = 3          # input_channels (Sigma_x/y/z)
    C1 = 16           # nonlinear_conv1_out_channels
    C2 = 8            # nonlinear_conv2_out_channels
    TC = C2           # T_out_channels must equal C2 for the model's wiring
    K, KF = 5, 3      # filter_size, final layer kernel

    key = jax.random.PRNGKey(0)
    keys = jax.random.split(key, 16)

    def conv_w(k_, kh, cin, cout):
        std = 1.0 / np.sqrt(cin * kh * kh)
        return jax.random.uniform(k_, (kh, kh, cin, cout), jnp.float32, -1.0, 1.0) * std

    def conv_b(k_, kh, cin, cout):
        std = 1.0 / np.sqrt(cin * kh * kh)
        return jax.random.uniform(k_, (cout,), jnp.float32, -1.0, 1.0) * std

    # f_mapping_layers[0]: NonlinearLayer C2 -> C1 -> C2, kernel 5
    f_w1 = conv_w(keys[0], K, C2, C1); f_b1 = conv_b(keys[1], K, C2, C1)
    f_g = jnp.ones((C1,), jnp.float32); f_be = jnp.zeros((C1,), jnp.float32)
    f_w2 = conv_w(keys[2], K, C1, C2); f_b2 = conv_b(keys[3], K, C1, C2)
    # T_layers_after_init[0]: shared conv weights, no bias; stored (5,5,1,TC)
    t_w0 = conv_w(keys[4], K, 1, TC)
    t_w1 = conv_w(keys[5], K, 1, TC)
    # g_mapping_layers[0]: NonlinearLayer C2 -> C1 -> C2, kernel 5
    g_w1 = conv_w(keys[6], K, C2, C1); g_b1 = conv_b(keys[7], K, C2, C1)
    g_g = jnp.ones((C1,), jnp.float32); g_be = jnp.zeros((C1,), jnp.float32)
    g_w2 = conv_w(keys[8], K, C1, C2); g_b2 = conv_b(keys[9], K, C1, C2)
    # final_mapping_layer: NonlinearLayer C2 -> C2 -> 1, kernel 3
    h_w1 = conv_w(keys[10], KF, C2, C2); h_b1 = conv_b(keys[11], KF, C2, C2)
    h_g = jnp.ones((C2,), jnp.float32); h_be = jnp.zeros((C2,), jnp.float32)
    h_w2 = conv_w(keys[12], KF, C2, 1); h_b2 = conv_b(keys[13], KF, C2, 1)

    # deterministic inputs (PyTorch NCHW convention)
    x_nchw = jax.random.normal(keys[14], (B, C_IN, N, N), jnp.float32)
    sn_nchw = jax.random.normal(keys[15], (B, C2, N, N), jnp.float32)

    params = (f_w1, f_b1, f_g, f_be, f_w2, f_b2,
              t_w0[:, :, 0, :], t_w1[:, :, 0, :],   # (5,5,TC) for the kernel path
              g_w1, g_b1, g_g, g_be, g_w2, g_b2,
              h_w1, h_b1, h_g, h_be, h_w2, h_b2)

    fwd = jax.jit(dsnn_qt_forward)
    e_kernel = jax.block_until_ready(fwd(x_nchw, sn_nchw, params))

    # independent plain-JAX reference path
    x_nhwc = jnp.transpose(x_nchw, (0, 2, 3, 1))
    sn_nhwc = jnp.transpose(sn_nchw, (0, 2, 3, 1))
    fn1 = _nl_ref(sn_nhwc, f_w1, f_b1, f_g, f_be, f_w2, f_b2)
    t = _t_ref(x_nhwc, t_w0, t_w1)
    g_out = _nl_ref(t, g_w1, g_b1, g_g, g_be, g_w2, g_b2)
    sn1 = fn1 * g_out
    fin = _nl_ref(sn1, h_w1, h_b1, h_g, h_be, h_w2, h_b2)
    e_ref = jnp.sum(fin, axis=(1, 2, 3))

    err = float(jnp.max(jnp.abs(e_kernel - e_ref) / (jnp.abs(e_ref) + 1.0)))
    if err > 1e-3:   # f32 MXU operand path
        raise RuntimeError(f"Pallas kernel mismatch vs reference: rel err {err}")

    print("KERNEL_OK")
</pallas_src>

<mosaic_0001>
module attributes {stable_mosaic.version = 11 : i64} {
  func.func @k(%arg0: memref<8x128xf32, #tpu.memory_space<vmem>>, %arg1: memref<8x128xf32, #tpu.memory_space<vmem>>) attributes {dimension_semantics = [], scalar_prefetch = 0 : i64, scratch_operands = 0 : i64, tpu.core_type = #tpu.core_type<tc>} {
    %c0 = arith.constant 0 : index
    %c0_0 = arith.constant 0 : index
    %0 = vector.load %arg0[%c0, %c0_0] : memref<8x128xf32, #tpu.memory_space<vmem>>, vector<8x128xf32>
    %c3_i32 = arith.constant 3 : i32
    %1 = tpu.dynamic_rotate %0 by %c3_i32 dim 1 : vector<8x128xf32>, i32 -> vector<8x128xf32>
    %c0_1 = arith.constant 0 : index
    %c0_2 = arith.constant 0 : index
    %2 = vector.load %arg1[%c0_1, %c0_2] : memref<8x128xf32, #tpu.memory_space<vmem>>, vector<8x128xf32>
    tpu.vector_store %arg1[%c0_1, %c0_2], %1 {strides = array<i32>} : memref<8x128xf32, #tpu.memory_space<vmem>>, vector<8x128xf32>,
    return
  }
}

</mosaic_0001>

<llo_original>
// kernel: tpu_custom_call.1
$region0: #{tpu_custom_call.1}
  #allocation0 [shape = 'u32[]', space=smem, size = 0x4, offset = 0x4, fixed_abs, tag = 'smem constant byte address 0x4 - core index']
  #allocation1 [shape = 'u32[144,128]{1,0:T(1,128)}', space=vmem, size = 0x12000, scoped, tag = 'internal scratch']
  %s0 = inlined_call_operand.hbm [shape: f32[8,128], index: 0, kind: input, shape index: {}]
  %s1 = inlined_call_operand.hbm [shape: f32[8,128], index: 1, kind: output, shape index: {}]
  %s2 = sld [smem:[#allocation0]]
  $region18: #{tpu_custom_call.1} parent=0
    _
  %s4 = ssub.s32 1, %s2
  %s5 = scalar_select 0, %s4, %s2
  $region1: #{tpu_custom_call.1} parent=0
    #allocation2 [shape = 'u8[4096]{0}', space=vmem, size = 0x1000, scoped, tag = 'input window, operand 0, single buffered']
    #allocation3 [shape = 's32[1]{0}', space=sflag, size = 0x4, scoped, tag = 'scoped memory for tpu_custom_call.1']
    #allocation4 [shape = 's32[1]{0}', space=sflag, size = 0x4, scoped, tag = 'scoped memory for tpu_custom_call.1']
    #allocation5 [shape = 'u8[4096]{0}', space=vmem, size = 0x1000, scoped, tag = 'output window, operand 0, single buffered']
    %6 = vsyncpa [#allocation3], 0
    %7 = vsyncpa [#allocation4], 0
    // Predicated region
    $region2: #{tpu_custom_call.1} parent=1 // pred_check
      _
    $region3: #{tpu_custom_call.1} parent=1 // pred_check_branch
      %9 = sbr.rel (0) target = $region5
    $region4: #{tpu_custom_call.1} parent=1 // pred_region
      %s11 = ssub.s32 128, 128
      %12 = vsyncadd [#allocation3], %s11
      %s14 = sshll.u32 [#allocation2], 4
      %s15 = int_to_ptr.vmem [resolvable:$true] %s14
      %17 = dma.hbm_to_vmem [thread:$0]  %s0, 128, %s15, [#allocation3]
    $region5: #{tpu_custom_call.1} parent=1 // pred_fallthru
      _
    // Predicated region
    $region6: #{tpu_custom_call.1} parent=1 // pred_check
      _
    $region7: #{tpu_custom_call.1} parent=1 // pred_check_branch
      %19 = sbr.rel (0) target = $region9
    $region8: #{tpu_custom_call.1} parent=1 // pred_region
      %20 = dma.done [#allocation3], 128
    $region9: #{tpu_custom_call.1} parent=1 // pred_fallthru
      _
    %v21 = vld [vmem:[#allocation2] sm:$0xff]
    %22 = vrot.lane.b32.xlu0 %v21, 3
    %v23 = vpop.permute.xlu0 %22
    %24 = vst [vmem:[#allocation5] sm:$0xff] %v23
    // Predicated region
    $region10: #{tpu_custom_call.1} parent=1 // pred_check
      _
    $region11: #{tpu_custom_call.1} parent=1 // pred_check_branch
      %26 = sbr.rel (0) target = $region13
    $region12: #{tpu_custom_call.1} parent=1 // pred_region
      %s28 = ssub.s32 128, 128
      %29 = vsyncadd [#allocation4], %s28
      %s31 = sshll.u32 [#allocation5], 4
      %s32 = int_to_ptr.vmem [resolvable:$true] %s31
      %34 = dma.vmem_to_hbm [thread:$0]  %s32, 128, %s1, [#allocation4]
    $region13: #{tpu_custom_call.1} parent=1 // pred_fallthru
      _
    // Predicated region
    $region14: #{tpu_custom_call.1} parent=1 // pred_check
      _
    $region15: #{tpu_custom_call.1} parent=1 // pred_check_branch
      %36 = sbr.rel (0) target = $region17
    $region16: #{tpu_custom_call.1} parent=1 // pred_region
      %37 = dma.done [#allocation4], 128
    $region17: #{tpu_custom_call.1} parent=1 // pred_fallthru
      _
    %38 = vsyncpa [#allocation3], 1
    %39 = vsyncpa [#allocation4], 1

</llo_original>
